<compile_context>
chip_gen: v7x
topology: tpu7x:2x2x1
jax: 0.10.0
libtpu: 0.0.40
codegen_flags: <defaults>
</compile_context>

<pallas_src>
import functools
import numpy as np
import jax
import jax.numpy as jnp
from jax.experimental import pallas as pl
from jax.experimental.pallas import tpu as pltpu


# ------------------------------ configuration --------------------------------

TASKS = ["semseg", "depth"]
TASK_CHANNELS = {"semseg": 5, "depth": 1}
C_IN, C_FEAT = 4, 32
CT_TOTAL = sum(TASK_CHANNELS[t] for t in TASKS)


def _round_up(v, m):
    return ((v + m - 1) // m) * m


# --------------------------- host-side constants ------------------------------

def _bilinear_matrix(in_size, out_size):
    """Row-interpolation matrix matching torch bilinear, align_corners=False."""
    scale = in_size / out_size
    dst = np.arange(out_size)
    src = (dst + 0.5) * scale - 0.5
    src = np.clip(src, 0.0, in_size - 1)
    i0 = np.minimum(np.floor(src).astype(np.int64), in_size - 1)
    i1 = np.minimum(i0 + 1, in_size - 1)
    lam = (src - i0).astype(np.float32)
    A = np.zeros((out_size, in_size), np.float32)
    A[dst, i0] += (1.0 - lam)
    A[dst, i1] += lam
    return A


def _im2col_s2_batched(x, Ho, Wo, bt, kp):
    """x: [N, C, H, W] -> [N//bt, kp, bt*Ho*Wo] im2col patches of the 3x3/stride-2/pad-1 conv.

    Rows are tap-major / channel-minor (matching the weight layout), followed by a ones row
    (bias lane) and zero padding up to kp.  The batch is folded into the lane (minor) dim.
    """
    N, C, H, W = x.shape
    xp = jnp.pad(x, ((0, 0), (0, 0), (1, 1), (1, 1)))
    taps = [xp[:, :, dy:dy + 2 * Ho:2, dx:dx + 2 * Wo:2]
            for dy in range(3) for dx in range(3)]
    p = jnp.stack(taps, axis=1).reshape(N, 9 * C, Ho * Wo)           # [(ky,kx,c), Ho*Wo]
    p = jnp.concatenate([p, jnp.ones((N, 1, Ho * Wo), p.dtype)], axis=1)   # ones row for biases
    p = jnp.pad(p, ((0, 0), (0, kp - (9 * C + 1)), (0, 0)))                # align sublanes
    ng = N // bt
    p = p.reshape(ng, bt, kp, Ho * Wo).transpose(0, 2, 1, 3)
    return p.reshape(ng, kp, bt * Ho * Wo)


# ------------------------------ fused kernel ----------------------------------

def _fused_mt_kernel(p_ref, wb_ref, wh_ref, m_ref, o_ref):
    # p_ref  : [1, KP, bt*Ho*Wo]  bf16  im2col patches (+ ones row, + zero pad), batch in lanes
    # wb_ref : [FP, KP]           bf16  conv weight | bias column | ones-passthrough row
    # wh_ref : [CT, FP]           bf16  concatenated 1x1 head weights | bias column
    # m_ref  : [bt*Ho*Wo, bt*H*W] bf16  block-diag kron(Ah, Aw) bilinear upsample matrix
    # o_ref  : [1, CT, bt*H*W]    f32
    feat = jnp.dot(wb_ref[...], p_ref[0], preferred_element_type=jnp.float32)
    feat = jnp.maximum(feat, 0.0)                           # ReLU (ones-passthrough row stays 1)
    y = jnp.dot(wh_ref[...], feat.astype(jnp.bfloat16),
                preferred_element_type=jnp.float32)         # heads + bias  -> [CT, bt*Ho*Wo]
    out = jnp.dot(y.astype(jnp.bfloat16), m_ref[...],
                  preferred_element_type=jnp.float32)       # bilinear      -> [CT, bt*H*W]
    o_ref[0] = out.astype(o_ref.dtype)


# ------------------------------- forward pass ----------------------------------

@jax.jit
def multitask_forward(params, x):
    """Equivalent of MultiTaskModel.forward (non-SAK backbone); returns {task: [N, ct, H, W]}."""
    N, C, H, W = x.shape
    Ho, Wo = (H + 1) // 2, (W + 1) // 2
    CT = CT_TOTAL

    KP = _round_up(9 * C + 1, 8)          # patch rows  (taps*channels + ones row), padded
    FP = _round_up(C_FEAT + 1, 8)         # feature rows (features + ones row), padded

    # batch tile: reach >=128-wide lanes, but keep >=2 grid steps when N allows (v7x: 2 TCs)
    bt = max(1, -(-128 // (Ho * Wo)))
    bt = min(bt, max(1, N // 2))
    ng = -(-N // bt)
    n_pad = ng * bt
    if n_pad != N:
        x = jnp.pad(x, ((0, n_pad - N), (0, 0), (0, 0), (0, 0)))

    # host-side im2col (only contiguous strided slices; no in-kernel relayout needed)
    patches = _im2col_s2_batched(x, Ho, Wo, bt, KP).astype(jnp.bfloat16)     # [ng, KP, bt*Ho*Wo]

    # encoder weight, tap-major / channel-minor, bias folded in, ones-passthrough row
    wb = params["backbone_w"].transpose(0, 2, 3, 1).reshape(C_FEAT, 9 * C)
    wb_aug = jnp.zeros((FP, KP), jnp.float32)
    wb_aug = wb_aug.at[:C_FEAT, :9 * C].set(wb)
    wb_aug = wb_aug.at[:C_FEAT, 9 * C].set(params["backbone_b"])
    wb_aug = wb_aug.at[C_FEAT, 9 * C].set(1.0)                # forwards the ones row through ReLU
    wb_aug = wb_aug.astype(jnp.bfloat16)

    # all task heads fused into one matrix, bias in the column that hits the ones row of feat
    wh = jnp.concatenate(
        [params["heads"][t][0].reshape(TASK_CHANNELS[t], C_FEAT) for t in TASKS], axis=0)
    bh = jnp.concatenate([params["heads"][t][1] for t in TASKS], axis=0)
    wh_aug = jnp.zeros((CT, FP), jnp.float32)
    wh_aug = wh_aug.at[:, :C_FEAT].set(wh)
    wh_aug = wh_aug.at[:, C_FEAT].set(bh)
    wh_aug = wh_aug.astype(jnp.bfloat16)

    # bilinear upsample as ONE matmul: block-diagonal (over batch slots) Kronecker matrix.
    # Output is already lane-dense [CT, bt*H*W], so no final relayout before the store.
    # TODO(synk): for large H*W the Kronecker matrix grows as (Ho*Wo)x(H*W); switch back to a
    #             separable two-matmul upsample in that regime.
    m = np.kron(_bilinear_matrix(Ho, H).T, _bilinear_matrix(Wo, W).T)        # [Ho*Wo, H*W]
    m_blk = jnp.asarray(np.kron(np.eye(bt, dtype=np.float32), m), jnp.bfloat16)

    flops = 2 * ng * (FP * KP * bt * Ho * Wo
                      + CT * FP * bt * Ho * Wo
                      + CT * (bt * Ho * Wo) * (bt * H * W))
    bytes_accessed = (patches.size * 2 + wb_aug.size * 2 + wh_aug.size * 2
                      + m_blk.size * 2 + ng * CT * bt * H * W * 4)

    out_flat = pl.pallas_call(
        _fused_mt_kernel,
        out_shape=jax.ShapeDtypeStruct((ng, CT, bt * H * W), jnp.float32),
        grid=(ng,),
        in_specs=[
            pl.BlockSpec((1, KP, bt * Ho * Wo), lambda n: (n, 0, 0)),
            pl.BlockSpec((FP, KP), lambda n: (0, 0)),              # VMEM-resident across grid
            pl.BlockSpec((CT, FP), lambda n: (0, 0)),
            pl.BlockSpec((bt * Ho * Wo, bt * H * W), lambda n: (0, 0)),
        ],
        out_specs=pl.BlockSpec((1, CT, bt * H * W), lambda n: (n, 0, 0)),
        compiler_params=pltpu.CompilerParams(dimension_semantics=("parallel",)),
        cost_estimate=pl.CostEstimate(flops=flops, transcendentals=0,
                                      bytes_accessed=bytes_accessed),
    )(patches, wb_aug, wh_aug, m_blk)

    # unfold the batch slots from the lane dimension (cheap host-side XLA transpose)
    out_nchw = out_flat.reshape(ng, CT, bt, H, W).transpose(0, 2, 1, 3, 4)
    out_nchw = out_nchw.reshape(n_pad, CT, H, W)[:N]

    out, c0 = {}, 0
    for t in TASKS:
        ct = TASK_CHANNELS[t]
        out[t] = out_nchw[:, c0:c0 + ct]
        c0 += ct
    return out


# ------------------------------ model setup ------------------------------------

def init_params(key):
    ks = jax.random.split(key, 2 + 2 * len(TASKS))
    params = {
        "backbone_w": 0.1 * jax.random.normal(ks[0], (C_FEAT, C_IN, 3, 3), jnp.float32),
        "backbone_b": 0.01 * jax.random.normal(ks[1], (C_FEAT,), jnp.float32),
        "heads": {},
    }
    for i, task in enumerate(TASKS):
        c_t = TASK_CHANNELS[task]
        w = 0.1 * jax.random.normal(ks[2 + 2 * i], (c_t, C_FEAT, 1, 1), jnp.float32)
        b = 0.01 * jax.random.normal(ks[3 + 2 * i], (c_t,), jnp.float32)
        params["heads"][task] = (w, b)
    return params


# --------------------------- pure-JAX reference --------------------------------

def reference_forward(params, x):
    """XLA reference.  Weights/biases are bf16-rounded to mirror the kernel's MXU operands
    (the kernel additionally rounds activations to bf16; covered by the 5e-2 tolerance)."""
    N, C, H, W = x.shape
    Ho, Wo = (H + 1) // 2, (W + 1) // 2
    r = lambda a: a.astype(jnp.bfloat16).astype(jnp.float32)
    feat = jax.lax.conv_general_dilated(
        x, r(params["backbone_w"]), window_strides=(2, 2), padding=((1, 1), (1, 1)),
        dimension_numbers=("NCHW", "OIHW", "NCHW"))
    feat = jax.nn.relu(feat + r(params["backbone_b"])[None, :, None, None])
    Ah = jnp.asarray(_bilinear_matrix(Ho, H))
    Aw = jnp.asarray(_bilinear_matrix(Wo, W))
    out = {}
    for t in TASKS:
        w_t, b_t = params["heads"][t]
        w2 = r(w_t).reshape(-1, C_FEAT)
        y = jnp.einsum("of,nfhw->nohw", w2, feat) + r(b_t)[None, :, None, None]
        y = jnp.einsum("Hh,nohw->noHw", Ah, y)
        y = jnp.einsum("Ww,noHw->noHW", Aw, y)
        out[t] = y
    return out


# ----------------------------------- main ---------------------------------------

if __name__ == "__main__":
    key = jax.random.PRNGKey(0)
    pkey, xkey = jax.random.split(key)
    params = init_params(pkey)
    # N=4 -> batch tile bt=2 (128-wide lanes) and grid=2 (both v7x TensorCores busy)
    x = jax.random.normal(xkey, (4, 4, 16, 16), jnp.float32)        # NCHW

    out = multitask_forward(params, x)
    out = jax.block_until_ready(out)

    assert out["semseg"].shape == (4, 5, 16, 16)
    assert out["depth"].shape == (4, 1, 16, 16)
    for v in out.values():
        assert bool(jnp.all(jnp.isfinite(v)))

    ref = reference_forward(params, x)
    for t in TASKS:
        assert bool(jnp.allclose(out[t], ref[t], atol=5e-2, rtol=5e-2)), t

    print("KERNEL_OK")
</pallas_src>

<mosaic_0001>
module attributes {stable_mosaic.version = 11 : i64} {
  func.func @_fused_mt_kernel(%arg0: i32, %arg1: memref<1x40x128xbf16, #tpu.memory_space<vmem>>, %arg2: memref<40x40xbf16, #tpu.memory_space<vmem>>, %arg3: memref<6x40xbf16, #tpu.memory_space<vmem>>, %arg4: memref<128x512xbf16, #tpu.memory_space<vmem>>, %arg5: memref<1x6x512xf32, #tpu.memory_space<vmem>>) attributes {dimension_semantics = [#tpu.dimension_semantics<parallel>], iteration_bounds = array<i64: 2>, scalar_prefetch = 0 : i64, scratch_operands = 0 : i64, tpu.core_type = #tpu.core_type<tc>, window_params = [{transform_indices = @transform_0, window_bounds = array<i64: 1, 40, 128>}, {pipeline_mode = #tpu.pipeline_mode<synchronous>, transform_indices = @transform_1, window_bounds = array<i64: 40, 40>}, {pipeline_mode = #tpu.pipeline_mode<synchronous>, transform_indices = @transform_2, window_bounds = array<i64: 6, 40>}, {pipeline_mode = #tpu.pipeline_mode<synchronous>, transform_indices = @transform_3, window_bounds = array<i64: 128, 512>}, {transform_indices = @transform_4, window_bounds = array<i64: 1, 6, 512>}]} {
    %c0 = arith.constant 0 : index
    %c0_0 = arith.constant 0 : index
    %0 = vector.load %arg2[%c0, %c0_0] : memref<40x40xbf16, #tpu.memory_space<vmem>>, vector<40x40xbf16>
    %c0_1 = arith.constant 0 : index
    %c0_2 = arith.constant 0 : index
    %c0_3 = arith.constant 0 : index
    %1 = vector.load %arg1[%c0_1, %c0_2, %c0_3] : memref<1x40x128xbf16, #tpu.memory_space<vmem>>, vector<1x40x128xbf16>
    %2 = vector.shape_cast %1 : vector<1x40x128xbf16> to vector<40x128xbf16>
    %cst = arith.constant dense<0.000000e+00> : vector<40x128xf32>
    %3 = tpu.matmul %0, %2, %cst {dimension_numbers = #tpu.dot_dimension_numbers<[1], [0], [0], [1], [0, 0, 1, 1], [], []>} : vector<40x40xbf16>, vector<40x128xbf16>, vector<40x128xf32> -> vector<40x128xf32>
    %cst_4 = arith.constant 0.000000e+00 : f32
    %4 = vector.broadcast %cst_4 : f32 to vector<40x128xf32>
    %5 = arith.maximumf %3, %4 : vector<40x128xf32>
    %c0_5 = arith.constant 0 : index
    %c0_6 = arith.constant 0 : index
    %6 = vector.load %arg3[%c0_5, %c0_6] : memref<6x40xbf16, #tpu.memory_space<vmem>>, vector<6x40xbf16>
    %7 = arith.truncf %5 : vector<40x128xf32> to vector<40x128xbf16>
    %cst_7 = arith.constant dense<0.000000e+00> : vector<6x128xf32>
    %8 = tpu.matmul %6, %7, %cst_7 {dimension_numbers = #tpu.dot_dimension_numbers<[1], [0], [0], [1], [0, 0, 1, 1], [], []>} : vector<6x40xbf16>, vector<40x128xbf16>, vector<6x128xf32> -> vector<6x128xf32>
    %9 = arith.truncf %8 : vector<6x128xf32> to vector<6x128xbf16>
    %c0_8 = arith.constant 0 : index
    %c0_9 = arith.constant 0 : index
    %10 = vector.load %arg4[%c0_8, %c0_9] : memref<128x512xbf16, #tpu.memory_space<vmem>>, vector<128x512xbf16>
    %cst_10 = arith.constant dense<0.000000e+00> : vector<6x512xf32>
    %11 = tpu.matmul %9, %10, %cst_10 {dimension_numbers = #tpu.dot_dimension_numbers<[1], [0], [0], [1], [0, 0, 1, 1], [], []>} : vector<6x128xbf16>, vector<128x512xbf16>, vector<6x512xf32> -> vector<6x512xf32>
    %c0_11 = arith.constant 0 : index
    %c0_12 = arith.constant 0 : index
    %c0_13 = arith.constant 0 : index
    %12 = vector.load %arg5[%c0_11, %c0_12, %c0_13] : memref<1x6x512xf32, #tpu.memory_space<vmem>>, vector<1x6x512xf32>
    %13 = vector.shape_cast %12 : vector<1x6x512xf32> to vector<6x512xf32>
    %14 = vector.shape_cast %11 : vector<6x512xf32> to vector<1x6x512xf32>
    tpu.vector_store %arg5[%c0_11, %c0_12, %c0_13], %14 {strides = array<i32>} : memref<1x6x512xf32, #tpu.memory_space<vmem>>, vector<1x6x512xf32>,
    return
  }
  func.func @transform_0(%arg0: i32) -> (i32, i32, i32) {
    %c0_i32 = arith.constant 0 : i32
    %c0_i32_0 = arith.constant 0 : i32
    %c0_i32_1 = arith.constant 0 : i32
    return %arg0, %c0_i32, %c0_i32_0 : i32, i32, i32
  }
  func.func @transform_1(%arg0: i32) -> (i32, i32) {
    %c0_i32 = arith.constant 0 : i32
    %c0_i32_0 = arith.constant 0 : i32
    %c0_i32_1 = arith.constant 0 : i32
    return %c0_i32, %c0_i32_0 : i32, i32
  }
  func.func @transform_2(%arg0: i32) -> (i32, i32) {
    %c0_i32 = arith.constant 0 : i32
    %c0_i32_0 = arith.constant 0 : i32
    %c0_i32_1 = arith.constant 0 : i32
    return %c0_i32, %c0_i32_0 : i32, i32
  }
  func.func @transform_3(%arg0: i32) -> (i32, i32) {
    %c0_i32 = arith.constant 0 : i32
    %c0_i32_0 = arith.constant 0 : i32
    %c0_i32_1 = arith.constant 0 : i32
    return %c0_i32, %c0_i32_0 : i32, i32
  }
  func.func @transform_4(%arg0: i32) -> (i32, i32, i32) {
    %c0_i32 = arith.constant 0 : i32
    %c0_i32_0 = arith.constant 0 : i32
    %c0_i32_1 = arith.constant 0 : i32
    return %arg0, %c0_i32, %c0_i32_0 : i32, i32, i32
  }
}

</mosaic_0001>

<llo_original>
// kernel: multitask_forward.1
$region0: #{multitask_forward.1}
  #allocation0 [shape = 'u32[]', space=smem, size = 0x4, offset = 0x4, fixed_abs, tag = 'smem constant byte address 0x4 - core index']
  #allocation1 [shape = 'u32[144,128]{1,0:T(1,128)}', space=vmem, size = 0x12000, scoped, tag = 'internal scratch']
  %s0 = inlined_call_operand.vmem [shape: bf16[2,40,128], index: 0, kind: input, shape index: {}]
  %s1 = inlined_call_operand.vmem [shape: bf16[40,40], index: 1, kind: input, shape index: {}]
  %s2 = inlined_call_operand.vmem [shape: bf16[6,40], index: 2, kind: input, shape index: {}]
  %s3 = inlined_call_operand.vmem [shape: bf16[128,512], index: 3, kind: input, shape index: {}]
  %s4 = inlined_call_operand.vmem [shape: f32[2,6,512], index: 4, kind: output, shape index: {}]
  %s5 = sld [smem:[#allocation0]]
  $region49: #{multitask_forward.1} parent=0
    _
  %s7 = ssub.s32 1, %s5
  %s8 = scalar_select 0, %s7, %s5
  loop: start=0, step=1, limit=4
  $region2: #{multitask_forward.1} parent=0 // loop_pre_header
    _
  $region3: #{multitask_forward.1} parent=0 // loop_header
    %s10 = sphi 0, %s14
    %p11 = scmp.ge.s32.totalorder %s10, 4
    %s20 = sphi 0, %s22
    %s23 = sphi 0, %s20
    %s24 = sphi 0, %s23
    %s40 = sphi 0, %s24
    %s44 = sphi 0, %s44
    %s46 = sphi 0, %s44
    %s47 = sphi 0, %s46
    %s61 = sphi 0, %s47
    %s65 = sphi 0, %s65
    %s67 = sphi 0, %s65
    %s68 = sphi 0, %s67
    %s82 = sphi 0, %s68
    %s86 = sphi 0, %s86
    %s88 = sphi 0, %s86
    %s89 = sphi 0, %s88
    %s103 = sphi 0, %s89
    %s109 = sphi 0, %s111
    %s112 = sphi 0, %s109
    %s113 = sphi 0, %s112
    %s129 = sphi 0, %s113
  $region4: #{multitask_forward.1} parent=0 // loop_header_branch
    %13 = sbr.rel (%p11) target = $region8
  $region5: #{multitask_forward.1} parent=0 // loop_body
    %s15 = ssub.s32 %s10, 1
    %s16 = ssub.s32 %s10, 2
    %s17 = sadd.s32 %s10, 1
    %s18 = ssub.s32 %s10, %s17
    %p19 = scmp.eq.s32.totalorder %s18, 0
    %s21 = sadd.s32 %s20, 1
    %s22 = scalar_select %p19, %s20, %s21
    %p25 = pneg %p19
    %p26 = scmp.eq.s32.totalorder %s10, 1
    %p27 = por %p25, %p26
    %p28 = scmp.ne.s32.totalorder %s20, %s23
    %p29 = scmp.eq.s32.totalorder %s10, 0
    %p30 = por %p28, %p29
    %p31 = scmp.ne.s32.totalorder %s20, %s23
    %p32 = scmp.eq.s32.totalorder %s15, 1
    %p33 = por %p31, %p32
    %p34 = scmp.ne.s32.totalorder %s23, %s24
    %p35 = scmp.eq.s32.totalorder %s15, 0
    %p36 = por %p34, %p35
    %p37 = scmp.ne.s32.totalorder %s23, %s24
    %p38 = scmp.eq.s32.totalorder %s16, 1
    %p39 = por %p37, %p38
    %p41 = scmp.ne.s32.totalorder %s24, %s40
    %p42 = scmp.eq.s32.totalorder %s16, 0
    %p43 = por %p41, %p42
    %s45 = sadd.s32 %s44, 1
    %p48 = scmp.eq.s32.totalorder %s10, 1
    %p49 = scmp.ne.s32.totalorder %s44, %s46
    %p50 = scmp.eq.s32.totalorder %s10, 0
    %p51 = por %p49, %p50
    %p52 = scmp.ne.s32.totalorder %s44, %s46
    %p53 = scmp.eq.s32.totalorder %s15, 1
    %p54 = por %p52, %p53
    %p55 = scmp.ne.s32.totalorder %s46, %s47
    %p56 = scmp.eq.s32.totalorder %s15, 0
    %p57 = por %p55, %p56
    %p58 = scmp.ne.s32.totalorder %s46, %s47
    %p59 = scmp.eq.s32.totalorder %s16, 1
    %p60 = por %p58, %p59
    %p62 = scmp.ne.s32.totalorder %s47, %s61
    %p63 = scmp.eq.s32.totalorder %s16, 0
    %p64 = por %p62, %p63
    %s66 = sadd.s32 %s65, 1
    %p69 = scmp.eq.s32.totalorder %s10, 1
    %p70 = scmp.ne.s32.totalorder %s65, %s67
    %p71 = scmp.eq.s32.totalorder %s10, 0
    %p72 = por %p70, %p71
    %p73 = scmp.ne.s32.totalorder %s65, %s67
    %p74 = scmp.eq.s32.totalorder %s15, 1
    %p75 = por %p73, %p74
    %p76 = scmp.ne.s32.totalorder %s67, %s68
    %p77 = scmp.eq.s32.totalorder %s15, 0
    %p78 = por %p76, %p77
    %p79 = scmp.ne.s32.totalorder %s67, %s68
    %p80 = scmp.eq.s32.totalorder %s16, 1
    %p81 = por %p79, %p80
    %p83 = scmp.ne.s32.totalorder %s68, %s82
    %p84 = scmp.eq.s32.totalorder %s16, 0
    %p85 = por %p83, %p84
    %s87 = sadd.s32 %s86, 1
    %p90 = scmp.eq.s32.totalorder %s10, 1
    %p91 = scmp.ne.s32.totalorder %s86, %s88
    %p92 = scmp.eq.s32.totalorder %s10, 0
    %p93 = por %p91, %p92
    %p94 = scmp.ne.s32.totalorder %s86, %s88
    %p95 = scmp.eq.s32.totalorder %s15, 1
    %p96 = por %p94, %p95
    %p97 = scmp.ne.s32.totalorder %s88, %s89
    %p98 = scmp.eq.s32.totalorder %s15, 0
    %p99 = por %p97, %p98
    %p100 = scmp.ne.s32.totalorder %s88, %s89
    %p101 = scmp.eq.s32.totalorder %s16, 1
    %p102 = por %p100, %p101
    %p104 = scmp.ne.s32.totalorder %s89, %s103
    %p105 = scmp.eq.s32.totalorder %s16, 0
    %p106 = por %p104, %p105
    %s107 = ssub.s32 %s10, %s17
    %p108 = scmp.eq.s32.totalorder %s107, 0
    %s110 = sadd.s32 %s109, 1
    %s111 = scalar_select %p108, %s109, %s110
    %p114 = pneg %p108
    %p115 = scmp.eq.s32.totalorder %s10, 1
    %p116 = por %p114, %p115
    %p117 = scmp.ne.s32.totalorder %s109, %s112
    %p118 = scmp.eq.s32.totalorder %s10, 0
    %p119 = por %p117, %p118
    %p120 = scmp.ne.s32.totalorder %s109, %s112
    %p121 = scmp.eq.s32.totalorder %s15, 1
    %p122 = por %p120, %p121
    %p123 = scmp.ne.s32.totalorder %s112, %s113
    %p124 = scmp.eq.s32.totalorder %s15, 0
    %p125 = por %p123, %p124
    %p126 = scmp.ne.s32.totalorder %s112, %s113
    %p127 = scmp.eq.s32.totalorder %s16, 1
    %p128 = por %p126, %p127
    %p130 = scmp.ne.s32.totalorder %s113, %s129
    %p131 = scmp.eq.s32.totalorder %s16, 0
    %p132 = por %p130, %p131
    %p133 = scmp.le.s32.totalorder 1, %s10
    %p134 = scmp.lt.s32.totalorder %s10, 3
    %p135 = pnand %p133, %p134
    %p136 = pneg %p135
    // Predicated region
    $region9: #{multitask_forward.1} parent=5 // pred_check
      _
    $region10: #{multitask_forward.1} parent=5 // pred_check_branch
      %138 = sbr.rel (%p135) target = $region12
    $region11: #{multitask_forward.1} parent=5 // pred_region
      %s139 = ssub.s32 %s10, 1
      // Predicated region
      $region13: #{multitask_forward.1} parent=11 // pred_check
        %p140 = pneg %p57
      $region14: #{multitask_forward.1} parent=11 // pred_check_branch
        %142 = sbr.rel (%p140) target = $region16
      $region15: #{multitask_forward.1} parent=11 // pred_region
        _
      $region16: #{multitask_forward.1} parent=11 // pred_fallthru
        _
      // Predicated region
      $region17: #{multitask_forward.1} parent=11 // pred_check
        %p143 = pneg %p78
      $region18: #{multitask_forward.1} parent=11 // pred_check_branch
        %145 = sbr.rel (%p143) target = $region20
      $region19: #{multitask_forward.1} parent=11 // pred_region
        _
      $region20: #{multitask_forward.1} parent=11 // pred_fallthru
        _
      // Predicated region
      $region21: #{multitask_forward.1} parent=11 // pred_check
        %p146 = pneg %p99
      $region22: #{multitask_forward.1} parent=11 // pred_check_branch
        %148 = sbr.rel (%p146) target = $region24
      $region23: #{multitask_forward.1} parent=11 // pred_region
        _
      $region24: #{multitask_forward.1} parent=11 // pred_fallthru
        _
    $region12: #{multitask_forward.1} parent=5 // pred_fallthru
      _
    %p149 = scmp.lt.s32.totalorder %s10, 2
    // Predicated region
    $region25: #{multitask_forward.1} parent=5 // pred_check
      %p150 = pneg %p149
    $region26: #{multitask_forward.1} parent=5 // pred_check_branch
      %152 = sbr.rel (%p150) target = $region28
    $region27: #{multitask_forward.1} parent=5 // pred_region
      // Predicated region
      $region29: #{multitask_forward.1} parent=27 // pred_check
        %p153 = pneg %p30
      $region30: #{multitask_forward.1} parent=27 // pred_check_branch
        %155 = sbr.rel (%p153) target = $region32
      $region31: #{multitask_forward.1} parent=27 // pred_region
        %p156 = scmp.lt.s32.totalorder %s10, 1
        %s157 = scalar_select %p156, %s10, 1
        %s158 = smul.addr %s157, 5
        %s159 = smul.addr %s158, 4
        %s160 = scalar_lea.vmem %s0, %s159
      $region32: #{multitask_forward.1} parent=27 // pred_fallthru
        _
    $region28: #{multitask_forward.1} parent=5 // pred_fallthru
      _
    %p161 = scmp.le.s32.totalorder 1, %s10
    %p162 = scmp.lt.s32.totalorder %s10, 3
    %p163 = pnand %p161, %p162
    %p164 = pneg %p163
    // Predicated region
    $region33: #{multitask_forward.1} parent=5 // pred_check
      _
    $region34: #{multitask_forward.1} parent=5 // pred_check_branch
      %166 = sbr.rel (%p163) target = $region36
    $region35: #{multitask_forward.1} parent=5 // pred_region
      %s167 = ssub.s32 %s10, 1
      %p168 = scmp.lt.s32.totalorder %s15, 1
      %s169 = scalar_select %p168, %s15, 1
      %s170 = smul.addr %s169, 5
      %s171 = smul.addr %s170, 4
      %s172 = scalar_lea.vmem %s0, %s171
      %p173 = pneg %p36
      %p174 = pneg %p33
      %p175 = pneg %p57
      %p176 = pneg %p54
      %p177 = pneg %p78
      %p178 = pneg %p75
      %p179 = pneg %p99
      %p180 = pneg %p96
      %p181 = pneg %p125
      %p182 = pneg %p122
      %p183 = scmp.lt.s32.totalorder %s15, 1
      %s184 = scalar_select %p183, %s15, 1
      %s185 = smul.addr %s184, 4
      %s186 = smul.addr %s185, 8
      %s187 = scalar_lea.vmem %s4, %s186
      %p188 = scmp.lt.s32.totalorder %s15, 1
      %s189 = scalar_select %p188, %s15, 1
      %s190 = smul.addr %s189, 5
      %s191 = smul.addr %s190, 4
      %s192 = scalar_lea.vmem %s0, %s191
      %p193 = scmp.lt.s32.totalorder %s15, 1
      %s194 = scalar_select %p193, %s15, 1
      %s195 = smul.addr %s194, 4
      %s196 = smul.addr %s195, 8
      %s197 = scalar_lea.vmem %s4, %s196
      %v199 = vld [vmem:[%s1] sm:$0xf]
      %v200 = vld [vmem:[%s1 + $0x4] sm:$0xf]
      %v201 = vld [vmem:[%s1 + $0x8] sm:$0xf]
      %v202 = vld [vmem:[%s1 + $0xc] sm:$0xf]
      %v203 = vld [vmem:[%s1 + $0x10] sm:$0xf]
      %v204 = vld [vmem:[%s192] sm:$0xf]
      %v205 = vld [vmem:[%s192 + $0x4] sm:$0xf]
      %v206 = vld [vmem:[%s192 + $0x8] sm:$0xf]
      %v207 = vld [vmem:[%s192 + $0xc] sm:$0xf]
      %v208 = vld [vmem:[%s192 + $0x10] sm:$0xf]
      %v214 = vunpack.c.l.b16 %v199
      %v215 = vunpack.c.l.b16 %v200
      %v216 = vunpack.c.l.b16 %v201
      %v217 = vunpack.c.l.b16 %v202
      %v218 = vunpack.c.l.b16 %v203
      %v219 = vpack.c.b16 %v215, %v214
      %v220 = vpack.c.b16 %v217, %v216
      %v221 = vpack.c.b16 %v218, %v218
      %v227 = vunpack.c.l.b16 %v204
      %v228 = vunpack.c.l.b16 %v205
      %v229 = vunpack.c.l.b16 %v206
      %v230 = vunpack.c.l.b16 %v207
      %v231 = vunpack.c.l.b16 %v208
      %v232 = vpack.c.b16 %v228, %v227
      %v233 = vpack.c.b16 %v230, %v229
      %v234 = vpack.c.b16 %v231, %v231
      %vm237 = vcmask 326656
      %v239 = vsel %vm237, %v219, 0
      %v242 = vsel %vm237, %v220, 0
      %v245 = vsel %vm237, %v221, 0
      %vm247 = vcmask 1043456
      %v249 = vsel %vm247, %v234, 0
      %251 = vmatprep.subr.bf16.mxu0 0
      %252 = vmatpush1.bf16.msra.mxu0 %v232
      %253 = vmatprep.subr.bf16.mxu0 0
      %254 = vmatpush1.bf16.msra.mxu0 %v233
      %255 = vmatprep.subr.bf16.mxu0 0
      %256 = vmatpush1.bf16.msra.mxu0 %v249
      %257 = vmatprep.subr.bf16.mxu0 0
      %258 = vmatpush1.bf16.msra.mxu0 0
      %259 = vmatprep.subr.bf16.mxu0 0
      %260 = vmatpush1.bf16.msra.mxu0 0
      %261 = vmatprep.subr.bf16.mxu0 0
      %262 = vmatpush1.bf16.msra.mxu0 0
      %263 = vmatprep.subr.bf16.mxu0 0
      %264 = vmatpush1.bf16.msra.mxu0 0
      %265 = vmatprep.subr.bf16.mxu0 0
      %266 = vmatpush1.bf16.msra.mxu0 0
      %267 = vmatprep.subr.bf16.mxu0 0
      %268 = vmatpush1.bf16.msra.mxu0 0
      %269 = vmatprep.subr.bf16.mxu0 0
      %270 = vmatpush1.bf16.msra.mxu0 0
      %271 = vmatprep.subr.bf16.mxu0 0
      %272 = vmatpush1.bf16.msra.mxu0 0
      %273 = vmatprep.subr.bf16.mxu0 0
      %274 = vmatpush1.bf16.msra.mxu0 0
      %275 = vmatprep.subr.bf16.mxu0 0
      %276 = vmatpush1.bf16.msra.mxu0 0
      %277 = vmatprep.subr.bf16.mxu0 0
      %278 = vmatpush1.bf16.msra.mxu0 0
      %279 = vmatprep.subr.bf16.mxu0 0
      %280 = vmatpush1.bf16.msra.mxu0 0
      %281 = vmatprep.subr.bf16.mxu0 0
      %282 = vmatpush1.bf16.msra.mxu0 0
      %283 = vmatprep.mubr.bf16.mxu0 0
      %284 = vmatmul.mubr.bf16.gmra.mrb[0].mxu0 %v239
      %v285 = vpop.f32.mrb[0].mxu0
      %v286 = vadd.f32 0.0, %v285
      %v287 = vpop.f32.mrb[0].mxu0
      %v288 = vpop.f32.mrb[0].mxu0
      %v289 = vadd.f32 0.0, %v288
      %v290 = vpop.f32.mrb[0].mxu0
      %291 = vmatprep.mubr.bf16.mxu0 0
      %292 = vmatmul.mubr.bf16.gmra.mrb[0].mxu0 %v242
      %v293 = vpop.f32.mrb[0].mxu0
      %v294 = vadd.f32 0.0, %v293
      %v295 = vpop.f32.mrb[0].mxu0
      %v296 = vpop.f32.mrb[0].mxu0
      %v297 = vadd.f32 0.0, %v296
      %v298 = vpop.f32.mrb[0].mxu0
      %299 = vmatprep.mubr.bf16.mxu0 0
      %300 = vmatmul.mubr.bf16.gmra.mrb[0].mxu0 %v245
      %v301 = vpop.f32.mrb[0].mxu0
      %v302 = vadd.f32 0.0, %v301
      %v303 = vpop.f32.mrb[0].mxu0
      %v304 = vpop.f32.mrb[0].mxu0
      %v305 = vpop.f32.mrb[0].mxu0
      %306 = vdwg.mxu0
      %v307 = vmax.f32 %v286, 0.0
      %v308 = vmax.f32 %v289, 0.0
      %v309 = vmax.f32 %v294, 0.0
      %v310 = vmax.f32 %v297, 0.0
      %v311 = vmax.f32 %v302, 0.0
      %v312 = vld [vmem:[%s2] sm:$0x7]
      %v313 = vpack.c.bf16 %v308, %v307
      %v314 = vpack.c.bf16 %v310, %v309
      %v315 = vpack.c.bf16 %v311, %v311
      %v317 = vsel %vm237, %v312, 0
      %v320 = vsel %vm247, %v315, 0
      %322 = vmatprep.subr.bf16.mxu0 0
      %323 = vmatpush1.bf16.msra.mxu0 %v313
      %324 = vmatprep.subr.bf16.mxu0 0
      %325 = vmatpush1.bf16.msra.mxu0 %v314
      %326 = vmatprep.subr.bf16.mxu0 0
      %327 = vmatpush1.bf16.msra.mxu0 %v320
      %328 = vmatprep.subr.bf16.mxu0 0
      %329 = vmatpush1.bf16.msra.mxu0 0
      %330 = vmatprep.subr.bf16.mxu0 0
      %331 = vmatpush1.bf16.msra.mxu0 0
      %332 = vmatprep.subr.bf16.mxu0 0
      %333 = vmatpush1.bf16.msra.mxu0 0
      %334 = vmatprep.subr.bf16.mxu0 0
      %335 = vmatpush1.bf16.msra.mxu0 0
      %336 = vmatprep.subr.bf16.mxu0 0
      %337 = vmatpush1.bf16.msra.mxu0 0
      %338 = vmatprep.subr.bf16.mxu0 0
      %339 = vmatpush1.bf16.msra.mxu0 0
      %340 = vmatprep.subr.bf16.mxu0 0
      %341 = vmatpush1.bf16.msra.mxu0 0
      %342 = vmatprep.subr.bf16.mxu0 0
      %343 = vmatpush1.bf16.msra.mxu0 0
      %344 = vmatprep.subr.bf16.mxu0 0
      %345 = vmatpush1.bf16.msra.mxu0 0
      %346 = vmatprep.subr.bf16.mxu0 0
      %347 = vmatpush1.bf16.msra.mxu0 0
      %348 = vmatprep.subr.bf16.mxu0 0
      %349 = vmatpush1.bf16.msra.mxu0 0
      %350 = vmatprep.subr.bf16.mxu0 0
      %351 = vmatpush1.bf16.msra.mxu0 0
      %352 = vmatprep.subr.bf16.mxu0 0
      %353 = vmatpush1.bf16.msra.mxu0 0
      %354 = vmatprep.mubr.bf16.mxu0 0
      %355 = vmatmul.mubr.bf16.gmra.mrb[0].mxu0 %v317
      %v356 = vpop.f32.mrb[0].mxu0
      %v357 = vadd.f32 0.0, %v356
      %v358 = vpop.f32.mrb[0].mxu0
      %v359 = vpop.f32.mrb[0].mxu0
      %v360 = vpop.f32.mrb[0].mxu0
      %361 = vdwg.mxu0
      %v362 = vpack.c.bf16 %v357, %v357
      %v363 = vld [vmem:[%s3] sm:$0xff]
      %v364 = vld [vmem:[%s3 + $0x8] sm:$0xff]
      %v365 = vld [vmem:[%s3 + $0x10] sm:$0xff]
      %v366 = vld [vmem:[%s3 + $0x18] sm:$0xff]
      %v367 = vld [vmem:[%s3 + $0x20] sm:$0xff]
      %v368 = vld [vmem:[%s3 + $0x28] sm:$0xff]
      %v369 = vld [vmem:[%s3 + $0x30] sm:$0xff]
      %v370 = vld [vmem:[%s3 + $0x38] sm:$0xff]
      %v371 = vld [vmem:[%s3 + $0x40] sm:$0xff]
      %v372 = vld [vmem:[%s3 + $0x48] sm:$0xff]
      %v373 = vld [vmem:[%s3 + $0x50] sm:$0xff]
      %v374 = vld [vmem:[%s3 + $0x58] sm:$0xff]
      %v375 = vld [vmem:[%s3 + $0x60] sm:$0xff]
      %v376 = vld [vmem:[%s3 + $0x68] sm:$0xff]
      %v377 = vld [vmem:[%s3 + $0x70] sm:$0xff]
      %v378 = vld [vmem:[%s3 + $0x78] sm:$0xff]
      %v379 = vld [vmem:[%s3 + $0x80] sm:$0xff]
      %v380 = vld [vmem:[%s3 + $0x88] sm:$0xff]
      %v381 = vld [vmem:[%s3 + $0x90] sm:$0xff]
      %v382 = vld [vmem:[%s3 + $0x98] sm:$0xff]
      %v383 = vld [vmem:[%s3 + $0xa0] sm:$0xff]
      %v384 = vld [vmem:[%s3 + $0xa8] sm:$0xff]
      %v385 = vld [vmem:[%s3 + $0xb0] sm:$0xff]
      %v386 = vld [vmem:[%s3 + $0xb8] sm:$0xff]
      %v387 = vld [vmem:[%s3 + $0xc0] sm:$0xff]
      %v388 = vld [vmem:[%s3 + $0xc8] sm:$0xff]
      %v389 = vld [vmem:[%s3 + $0xd0] sm:$0xff]
      %v390 = vld [vmem:[%s3 + $0xd8] sm:$0xff]
      %v391 = vld [vmem:[%s3 + $0xe0] sm:$0xff]
      %v392 = vld [vmem:[%s3 + $0xe8] sm:$0xff]
      %v393 = vld [vmem:[%s3 + $0xf0] sm:$0xff]
      %v394 = vld [vmem:[%s3 + $0xf8] sm:$0xff]
      %v427 = vunpack.c.l.b16 %v363
      %v428 = vunpack.c.h.b16 %v363
      %v429 = vunpack.c.l.b16 %v364
      %v430 = vunpack.c.h.b16 %v364
      %v431 = vunpack.c.l.b16 %v365
      %v432 = vunpack.c.h.b16 %v365
      %v433 = vunpack.c.l.b16 %v366
      %v434 = vunpack.c.h.b16 %v366
      %v435 = vunpack.c.l.b16 %v367
      %v436 = vunpack.c.h.b16 %v367
      %v437 = vunpack.c.l.b16 %v368
      %v438 = vunpack.c.h.b16 %v368
      %v439 = vunpack.c.l.b16 %v369
      %v440 = vunpack.c.h.b16 %v369
      %v441 = vunpack.c.l.b16 %v370
      %v442 = vunpack.c.h.b16 %v370
      %v443 = vunpack.c.l.b16 %v371
      %v444 = vunpack.c.h.b16 %v371
      %v445 = vunpack.c.l.b16 %v372
      %v446 = vunpack.c.h.b16 %v372
      %v447 = vunpack.c.l.b16 %v373
      %v448 = vunpack.c.h.b16 %v373
      %v449 = vunpack.c.l.b16 %v374
      %v450 = vunpack.c.h.b16 %v374
      %v451 = vunpack.c.l.b16 %v375
      %v452 = vunpack.c.h.b16 %v375
      %v453 = vunpack.c.l.b16 %v376
      %v454 = vunpack.c.h.b16 %v376
      %v455 = vunpack.c.l.b16 %v377
      %v456 = vunpack.c.h.b16 %v377
      %v457 = vunpack.c.l.b16 %v378
      %v458 = vunpack.c.h.b16 %v378
      %v459 = vunpack.c.l.b16 %v379
      %v460 = vunpack.c.h.b16 %v379
      %v461 = vunpack.c.l.b16 %v380
      %v462 = vunpack.c.h.b16 %v380
      %v463 = vunpack.c.l.b16 %v381
      %v464 = vunpack.c.h.b16 %v381
      %v465 = vunpack.c.l.b16 %v382
      %v466 = vunpack.c.h.b16 %v382
      %v467 = vunpack.c.l.b16 %v383
      %v468 = vunpack.c.h.b16 %v383
      %v469 = vunpack.c.l.b16 %v384
      %v470 = vunpack.c.h.b16 %v384
      %v471 = vunpack.c.l.b16 %v385
      %v472 = vunpack.c.h.b16 %v385
      %v473 = vunpack.c.l.b16 %v386
      %v474 = vunpack.c.h.b16 %v386
      %v475 = vunpack.c.l.b16 %v387
      %v476 = vunpack.c.h.b16 %v387
      %v477 = vunpack.c.l.b16 %v388
      %v478 = vunpack.c.h.b16 %v388
      %v479 = vunpack.c.l.b16 %v389
      %v480 = vunpack.c.h.b16 %v389
      %v481 = vunpack.c.l.b16 %v390
      %v482 = vunpack.c.h.b16 %v390
      %v483 = vunpack.c.l.b16 %v391
      %v484 = vunpack.c.h.b16 %v391
      %v485 = vunpack.c.l.b16 %v392
      %v486 = vunpack.c.h.b16 %v392
      %v487 = vunpack.c.l.b16 %v393
      %v488 = vunpack.c.h.b16 %v393
      %v489 = vunpack.c.l.b16 %v394
      %v490 = vunpack.c.h.b16 %v394
      %v491 = vpack.c.b16 %v431, %v427
      %v492 = vpack.c.b16 %v432, %v428
      %v493 = vpack.c.b16 %v433, %v429
      %v494 = vpack.c.b16 %v434, %v430
      %v495 = vpack.c.b16 %v439, %v435
      %v496 = vpack.c.b16 %v440, %v436
      %v497 = vpack.c.b16 %v441, %v437
      %v498 = vpack.c.b16 %v442, %v438
      %v499 = vpack.c.b16 %v447, %v443
      %v500 = vpack.c.b16 %v448, %v444
      %v501 = vpack.c.b16 %v449, %v445
      %v502 = vpack.c.b16 %v450, %v446
      %v503 = vpack.c.b16 %v455, %v451
      %v504 = vpack.c.b16 %v456, %v452
      %v505 = vpack.c.b16 %v457, %v453
      %v506 = vpack.c.b16 %v458, %v454
      %v507 = vpack.c.b16 %v463, %v459
      %v508 = vpack.c.b16 %v464, %v460
      %v509 = vpack.c.b16 %v465, %v461
      %v510 = vpack.c.b16 %v466, %v462
      %v511 = vpack.c.b16 %v471, %v467
      %v512 = vpack.c.b16 %v472, %v468
      %v513 = vpack.c.b16 %v473, %v469
      %v514 = vpack.c.b16 %v474, %v470
      %v515 = vpack.c.b16 %v479, %v475
      %v516 = vpack.c.b16 %v480, %v476
      %v517 = vpack.c.b16 %v481, %v477
      %v518 = vpack.c.b16 %v482, %v478
      %v519 = vpack.c.b16 %v487, %v483
      %v520 = vpack.c.b16 %v488, %v484
      %v521 = vpack.c.b16 %v489, %v485
      %v522 = vpack.c.b16 %v490, %v486
      %555 = vmatprep.subr.bf16.mxu0 %v492
      %556 = vmatpush1.bf16.msra.mxu0 %v491
      %557 = vmatprep.subr.bf16.mxu0 %v496
      %558 = vmatpush1.bf16.msra.mxu0 %v495
      %559 = vmatprep.subr.bf16.mxu0 %v500
      %560 = vmatpush1.bf16.msra.mxu0 %v499
      %561 = vmatprep.subr.bf16.mxu0 %v504
      %562 = vmatpush1.bf16.msra.mxu0 %v503
      %563 = vmatprep.subr.bf16.mxu0 %v508
      %564 = vmatpush1.bf16.msra.mxu0 %v507
      %565 = vmatprep.subr.bf16.mxu0 %v512
      %566 = vmatpush1.bf16.msra.mxu0 %v511
      %567 = vmatprep.subr.bf16.mxu0 %v516
      %568 = vmatpush1.bf16.msra.mxu0 %v515
      %569 = vmatprep.subr.bf16.mxu0 %v520
      %570 = vmatpush1.bf16.msra.mxu0 %v519
      %571 = vmatprep.subr.bf16.mxu0 0
      %572 = vmatpush1.bf16.msra.mxu0 0
      %573 = vmatprep.subr.bf16.mxu0 0
      %574 = vmatpush1.bf16.msra.mxu0 0
      %575 = vmatprep.subr.bf16.mxu0 0
      %576 = vmatpush1.bf16.msra.mxu0 0
      %577 = vmatprep.subr.bf16.mxu0 0
      %578 = vmatpush1.bf16.msra.mxu0 0
      %579 = vmatprep.subr.bf16.mxu0 0
      %580 = vmatpush1.bf16.msra.mxu0 0
      %581 = vmatprep.subr.bf16.mxu0 0
      %582 = vmatpush1.bf16.msra.mxu0 0
      %583 = vmatprep.subr.bf16.mxu0 0
      %584 = vmatpush1.bf16.msra.mxu0 0
      %585 = vmatprep.subr.bf16.mxu0 0
      %586 = vmatpush1.bf16.msra.mxu0 0
      %587 = vmatprep.mubr.bf16.mxu0 0
      %588 = vmatmul.mubr.bf16.gmra.mrb[0].mxu0 %v362
      %v589 = vpop.f32.mrb[0].mxu0
      %v590 = vadd.f32 0.0, %v589
      %v591 = vpop.f32.mrb[0].mxu0
      %v592 = vadd.f32 0.0, %v591
      %v593 = vpop.f32.mrb[0].mxu0
      %v594 = vpop.f32.mrb[0].mxu0
      %595 = vdwg.mxu0
      %596 = vmatprep.subr.bf16.mxu0 %v494
      %597 = vmatpush1.bf16.msra.mxu0 %v493
      %598 = vmatprep.subr.bf16.mxu0 %v498
      %599 = vmatpush1.bf16.msra.mxu0 %v497
      %600 = vmatprep.subr.bf16.mxu0 %v502
      %601 = vmatpush1.bf16.msra.mxu0 %v501
      %602 = vmatprep.subr.bf16.mxu0 %v506
      %603 = vmatpush1.bf16.msra.mxu0 %v505
      %604 = vmatprep.subr.bf16.mxu0 %v510
      %605 = vmatpush1.bf16.msra.mxu0 %v509
      %606 = vmatprep.subr.bf16.mxu0 %v514
      %607 = vmatpush1.bf16.msra.mxu0 %v513
      %608 = vmatprep.subr.bf16.mxu0 %v518
      %609 = vmatpush1.bf16.msra.mxu0 %v517
      %610 = vmatprep.subr.bf16.mxu0 %v522
      %611 = vmatpush1.bf16.msra.mxu0 %v521
      %612 = vmatprep.subr.bf16.mxu0 0
      %613 = vmatpush1.bf16.msra.mxu0 0
      %614 = vmatprep.subr.bf16.mxu0 0
      %615 = vmatpush1.bf16.msra.mxu0 0
      %616 = vmatprep.subr.bf16.mxu0 0
      %617 = vmatpush1.bf16.msra.mxu0 0
      %618 = vmatprep.subr.bf16.mxu0 0
      %619 = vmatpush1.bf16.msra.mxu0 0
      %620 = vmatprep.subr.bf16.mxu0 0
      %621 = vmatpush1.bf16.msra.mxu0 0
      %622 = vmatprep.subr.bf16.mxu0 0
      %623 = vmatpush1.bf16.msra.mxu0 0
      %624 = vmatprep.subr.bf16.mxu0 0
      %625 = vmatpush1.bf16.msra.mxu0 0
      %626 = vmatprep.subr.bf16.mxu0 0
      %627 = vmatpush1.bf16.msra.mxu0 0
      %628 = vmatprep.mubr.bf16.mxu0 0
      %629 = vmatmul.mubr.bf16.gmra.mrb[0].mxu0 %v362
      %v630 = vpop.f32.mrb[0].mxu0
      %v631 = vadd.f32 0.0, %v630
      %v632 = vpop.f32.mrb[0].mxu0
      %v633 = vadd.f32 0.0, %v632
      %v634 = vpop.f32.mrb[0].mxu0
      %v635 = vpop.f32.mrb[0].mxu0
      %636 = vdwg.mxu0
      %637 = vst [vmem:[%s197] sm:$0x3f] %v590
      %638 = vst [vmem:[%s197 + $0x8] sm:$0x3f] %v592
      %639 = vst [vmem:[%s197 + $0x10] sm:$0x3f] %v631
      %640 = vst [vmem:[%s197 + $0x18] sm:$0x3f] %v633
      %p641 = scmp.lt.s32.totalorder %s15, 1
      %s642 = scalar_select %p641, %s15, 1
      %s643 = smul.addr %s642, 4
      %s644 = smul.addr %s643, 8
      %s645 = scalar_lea.vmem %s4, %s644
      // Predicated region
      $region37: #{multitask_forward.1} parent=35 // pred_check
        %p646 = pneg %p122
      $region38: #{multitask_forward.1} parent=35 // pred_check_branch
        %648 = sbr.rel (%p646) target = $region40
      $region39: #{multitask_forward.1} parent=35 // pred_region
        _
      $region40: #{multitask_forward.1} parent=35 // pred_fallthru
        _
    $region36: #{multitask_forward.1} parent=5 // pred_fallthru
      _
    %p649 = scmp.le.s32.totalorder 2, %s10
    // Predicated region
    $region41: #{multitask_forward.1} parent=5 // pred_check
      %p650 = pneg %p649
    $region42: #{multitask_forward.1} parent=5 // pred_check_branch
      %652 = sbr.rel (%p650) target = $region44
    $region43: #{multitask_forward.1} parent=5 // pred_region
      %s653 = ssub.s32 %s10, 2
      // Predicated region
      $region45: #{multitask_forward.1} parent=43 // pred_check
        %p654 = pneg %p128
      $region46: #{multitask_forward.1} parent=43 // pred_check_branch
        %656 = sbr.rel (%p654) target = $region48
      $region47: #{multitask_forward.1} parent=43 // pred_region
        %p657 = scmp.lt.s32.totalorder %s16, 1
        %s658 = scalar_select %p657, %s16, 1
        %s659 = smul.addr %s658, 4
        %s660 = smul.addr %s659, 8
        %s661 = scalar_lea.vmem %s4, %s660
      $region48: #{multitask_forward.1} parent=43 // pred_fallthru
        _
    $region44: #{multitask_forward.1} parent=5 // pred_fallthru
      _
  $region6: #{multitask_forward.1} parent=0 // loop_footer
    %s14 = sadd.s32 1, %s10
  $region7: #{multitask_forward.1} parent=0 // loop_footer_branch
    %9 = sbr.rel target = $region3
  $region8: #{multitask_forward.1} parent=0 // loop_exit
    _

</llo_original>
